<compile_context>
chip_gen: v7x
topology: tpu7x:2x2x1
jax: 0.10.0
libtpu: 0.0.40
codegen_flags: <defaults>
</compile_context>

<pallas_src>
import jax
import jax.numpy as jnp
from jax.experimental import pallas as pl
from jax.experimental.pallas import tpu as pltpu


def _mlp_kernel(x_ref, w1_ref, b1_ref, w2_ref, b2_ref, o_ref):
    # x_ref : (IN, TILE_B)   f32  -- batch tile, batch on the lane axis (gridded)
    # w1_ref: (HID, IN)      f32  -- PyTorch (out, in) layout, VMEM-resident
    # b1_ref: (HID, 1)       f32  -- VMEM-resident column
    # w2_ref: (HID, 1)       f32  -- layer-2 weight column (OUT=1), VMEM-resident
    # b2_ref: (1,)           f32  -- scalar in SMEM
    # o_ref : (OUT=1, TILE_B) f32 -- lane-dense output tile
    in_size = x_ref.shape[0]
    x = x_ref[...]                                    # (IN, TILE_B) f32

    # Layer 1 on the VPU: h = b1 + sum_i W1[:, i] (x) x[i, :]  -> (HID, TILE_B).
    # IN broadcast-FMAs; skips the MXU entirely (K=2 would be pure fill/drain).
    h = b1_ref[...]                                   # (HID, 1), broadcasts below
    for i in range(in_size):                          # unrolled at trace time
        h = h + w1_ref[:, i:i + 1] * x[i:i + 1, :]    # (HID,1)*(1,TILE_B)
    h = jnp.maximum(h, 0.0)                           # ReLU, full-width VPU, f32

    # Layer 2 (OUT=1) on VPU + XLU: multiply by the w2 column and reduce over
    # the <=8 HID sublanes.  Keeps h in f32 (no bf16 re-feed), frees the MXU.
    z = jnp.sum(w2_ref[...] * h, axis=0, keepdims=True) + b2_ref[0]  # (1, TILE_B)

    # Exact sigmoid: exp on the EUP, exact divide (calibrated probabilities).
    o_ref[...] = 1.0 / (1.0 + jnp.exp(-z))


def _vmem_budget_bytes(in_size, hid, tile_b):
    """Explicit scoped-VMEM budget: double-buffered x/out tiles + resident
    params (counted double-buffered), 2x headroom + compiler scratch margin."""
    f32 = 4
    streamed = 2 * (in_size * tile_b * f32) + 2 * (tile_b * f32)
    resident = 2 * (hid * in_size + 2 * hid) * f32
    return int(2 * (streamed + resident)) + (8 << 20)


def binary_classifier_forward(x, w1, b1, w2, b2, *, tile_b=None):
    """Forward pass of BinaryClassifier.

    x : (B, input_size) f32
    w1: (hidden, input_size), b1: (hidden,)   -- PyTorch nn.Linear layout
    w2: (output, hidden),     b2: (output,)   -- output must be 1 (binary head)
    Returns (B, output) f32.

    tile_b=None -> whole batch in one grid step (right call at toy sizes).
    Production batches: sweep tile_b in 512-2048 (multiples of 128) and keep
    >= 2 grid steps on v7x so the "parallel" batch axis feeds both TensorCores.
    """
    B, in_size = x.shape
    hid = w1.shape[0]
    out_size = w2.shape[0]
    assert out_size == 1, "kernel specialized to output_size=1 (binary head)"
    # TODO(synk): for input_size >= ~128 route layer 1 through an MXU
    # dot_general instead of the unrolled VPU FMAs below.

    if tile_b is None or tile_b >= B:
        tile_b = B
        n_tiles = 1
        b_pad = B
    else:
        assert tile_b % 128 == 0, "multi-step grid requires tile_b % 128 == 0"
        n_tiles = (B + tile_b - 1) // tile_b
        b_pad = n_tiles * tile_b

    # Layout plumbing only: batch onto the lane axis; all operands stay f32
    # (no wrapper astype pass over x -- the dominant HBM stream stays 4 B/elem
    # read once by the kernel DMA).
    x_t = x.astype(jnp.float32).T                     # (IN, B)
    if b_pad != B:
        x_t = jnp.pad(x_t, ((0, 0), (0, b_pad - B)))  # padded cols sliced off below
    w1_f = w1.astype(jnp.float32)                     # (HID, IN)
    b1_col = b1.astype(jnp.float32).reshape(hid, 1)   # (HID, 1)
    w2_col = w2.astype(jnp.float32).reshape(hid, 1)   # (HID, 1) since OUT=1
    b2_vec = b2.astype(jnp.float32).reshape(out_size)  # (1,) scalar for SMEM

    out_t = pl.pallas_call(
        _mlp_kernel,
        out_shape=jax.ShapeDtypeStruct((out_size, b_pad), jnp.float32),
        grid=(n_tiles,),
        in_specs=[
            pl.BlockSpec((in_size, tile_b), lambda i: (0, i)),   # x: streamed batch tile
            pl.BlockSpec((hid, in_size), lambda i: (0, 0)),      # W1: VMEM-resident
            pl.BlockSpec((hid, 1), lambda i: (0, 0)),            # b1: VMEM-resident
            pl.BlockSpec((hid, 1), lambda i: (0, 0)),            # w2 column: resident
            pl.BlockSpec(memory_space=pltpu.MemorySpace.SMEM),   # b2: SMEM scalar
        ],
        out_specs=pl.BlockSpec((out_size, tile_b), lambda i: (0, i)),  # lane-dense
        compiler_params=pltpu.CompilerParams(
            dimension_semantics=("parallel",),
            vmem_limit_bytes=_vmem_budget_bytes(in_size, hid, tile_b),
        ),
    )(x_t, w1_f, b1_col, w2_col, b2_vec)

    # (1, B_pad) -> (B, 1); the [:B] slice also drops any padded batch columns.
    return out_t.T[:B]


def _reference_forward(x, w1, b1, w2, b2):
    h = jnp.maximum(x @ w1.T + b1, 0.0)
    return jax.nn.sigmoid(h @ w2.T + b2)


if __name__ == "__main__":
    input_size, hidden_size, output_size = 2, 5, 1

    key = jax.random.PRNGKey(0)
    kx, k1, k2, k3, k4 = jax.random.split(key, 5)

    # Deterministic synthetic parameters (PyTorch nn.Linear shapes).
    x = jax.random.normal(kx, (256, input_size), dtype=jnp.float32)
    w1 = jax.random.normal(k1, (hidden_size, input_size), dtype=jnp.float32) * 0.5
    b1 = jax.random.normal(k2, (hidden_size,), dtype=jnp.float32) * 0.1
    w2 = jax.random.normal(k3, (output_size, hidden_size), dtype=jnp.float32) * 0.5
    b2 = jax.random.normal(k4, (output_size,), dtype=jnp.float32) * 0.1

    y_ref = _reference_forward(x, w1, b1, w2, b2)

    # Case 1: toy batch, single grid step (review: collapse the grid here).
    y = jax.block_until_ready(binary_classifier_forward(x, w1, b1, w2, b2))
    assert y.shape == (256, output_size)
    err = float(jnp.max(jnp.abs(y - y_ref)))
    assert err < 1e-5, f"single-step mismatch vs reference: max abs err {err}"

    # Case 2: ragged batch + multi-step grid (exercises padding + pipelining).
    x2 = x[:200]
    y2 = jax.block_until_ready(
        binary_classifier_forward(x2, w1, b1, w2, b2, tile_b=128))
    assert y2.shape == (200, output_size)
    err2 = float(jnp.max(jnp.abs(y2 - y_ref[:200])))
    assert err2 < 1e-5, f"multi-step mismatch vs reference: max abs err {err2}"

    print("KERNEL_OK")
</pallas_src>

<mosaic_0001>
module attributes {stable_mosaic.version = 11 : i64} {
  func.func @_mlp_kernel(%arg0: i32, %arg1: memref<2x256xf32, #tpu.memory_space<vmem>>, %arg2: memref<5x2xf32, #tpu.memory_space<vmem>>, %arg3: memref<5x1xf32, #tpu.memory_space<vmem>>, %arg4: memref<5x1xf32, #tpu.memory_space<vmem>>, %arg5: memref<1xf32, #tpu.memory_space<smem>>, %arg6: memref<1x256xf32, #tpu.memory_space<vmem>>) attributes {dimension_semantics = [#tpu.dimension_semantics<parallel>], iteration_bounds = array<i64: 1>, scalar_prefetch = 0 : i64, scratch_operands = 0 : i64, tpu.core_type = #tpu.core_type<tc>, window_params = [{transform_indices = @transform_0, window_bounds = array<i64: 2, 256>}, {pipeline_mode = #tpu.pipeline_mode<synchronous>, transform_indices = @transform_1, window_bounds = array<i64: 5, 2>}, {pipeline_mode = #tpu.pipeline_mode<synchronous>, transform_indices = @transform_2, window_bounds = array<i64: 5, 1>}, {pipeline_mode = #tpu.pipeline_mode<synchronous>, transform_indices = @transform_3, window_bounds = array<i64: 5, 1>}, {transform_indices = @transform_4, window_bounds = array<i64: 1>}, {transform_indices = @transform_5, window_bounds = array<i64: 1, 256>}]} {
    %c0 = arith.constant 0 : index
    %c0_0 = arith.constant 0 : index
    %0 = vector.load %arg1[%c0, %c0_0] : memref<2x256xf32, #tpu.memory_space<vmem>>, vector<2x256xf32>
    %c0_1 = arith.constant 0 : index
    %c0_2 = arith.constant 0 : index
    %1 = vector.load %arg3[%c0_1, %c0_2] : memref<5x1xf32, #tpu.memory_space<vmem>>, vector<5x1xf32>
    %c0_3 = arith.constant 0 : index
    %c0_4 = arith.constant 0 : index
    %2 = vector.load %arg2[%c0_3, %c0_4] : memref<5x2xf32, #tpu.memory_space<vmem>>, vector<5x1xf32>
    %3 = vector.extract_strided_slice %0 {offsets = [0, 0], sizes = [1, 256], strides = [1, 1]} : vector<2x256xf32> to vector<1x256xf32>
    %4 = vector.broadcast %2 : vector<5x1xf32> to vector<5x256xf32>
    %5 = vector.broadcast %3 : vector<1x256xf32> to vector<5x256xf32>
    %6 = arith.mulf %4, %5 : vector<5x256xf32>
    %7 = vector.broadcast %1 : vector<5x1xf32> to vector<5x256xf32>
    %8 = arith.addf %7, %6 : vector<5x256xf32>
    %c0_5 = arith.constant 0 : index
    %c1 = arith.constant 1 : index
    %9 = vector.load %arg2[%c0_5, %c1] : memref<5x2xf32, #tpu.memory_space<vmem>>, vector<5x1xf32>
    %10 = vector.extract_strided_slice %0 {offsets = [1, 0], sizes = [1, 256], strides = [1, 1]} : vector<2x256xf32> to vector<1x256xf32>
    %11 = vector.broadcast %9 : vector<5x1xf32> to vector<5x256xf32>
    %12 = vector.broadcast %10 : vector<1x256xf32> to vector<5x256xf32>
    %13 = arith.mulf %11, %12 : vector<5x256xf32>
    %14 = arith.addf %8, %13 : vector<5x256xf32>
    %cst = arith.constant 0.000000e+00 : f32
    %15 = vector.broadcast %cst : f32 to vector<5x256xf32>
    %16 = arith.maximumf %14, %15 : vector<5x256xf32>
    %c0_6 = arith.constant 0 : index
    %c0_7 = arith.constant 0 : index
    %17 = vector.load %arg4[%c0_6, %c0_7] : memref<5x1xf32, #tpu.memory_space<vmem>>, vector<5x1xf32>
    %18 = vector.broadcast %17 : vector<5x1xf32> to vector<5x256xf32>
    %19 = arith.mulf %18, %16 : vector<5x256xf32>
    %cst_8 = arith.constant dense<0.000000e+00> : vector<256xf32>
    %20 = vector.multi_reduction <add>, %19, %cst_8 [0] : vector<5x256xf32> to vector<256xf32>
    %21 = vector.shape_cast %20 : vector<256xf32> to vector<1x256xf32>
    %c0_9 = arith.constant 0 : index
    %22 = memref.load %arg5[%c0_9] : memref<1xf32, #tpu.memory_space<smem>>
    %23 = vector.broadcast %22 : f32 to vector<1x256xf32>
    %24 = arith.addf %21, %23 : vector<1x256xf32>
    %cst_10 = arith.constant 0.000000e+00 : f32
    %25 = vector.broadcast %cst_10 : f32 to vector<1x256xf32>
    %26 = arith.subf %25, %24 : vector<1x256xf32>
    %27 = math.exp %26 : vector<1x256xf32>
    %cst_11 = arith.constant 1.000000e+00 : f32
    %28 = vector.broadcast %cst_11 : f32 to vector<1x256xf32>
    %29 = arith.addf %28, %27 : vector<1x256xf32>
    %cst_12 = arith.constant 1.000000e+00 : f32
    %30 = vector.broadcast %cst_12 : f32 to vector<1x256xf32>
    %31 = arith.divf %30, %29 : vector<1x256xf32>
    %c0_13 = arith.constant 0 : index
    %c0_14 = arith.constant 0 : index
    %32 = vector.load %arg6[%c0_13, %c0_14] : memref<1x256xf32, #tpu.memory_space<vmem>>, vector<1x256xf32>
    tpu.vector_store %arg6[%c0_13, %c0_14], %31 {strides = array<i32>} : memref<1x256xf32, #tpu.memory_space<vmem>>, vector<1x256xf32>,
    return
  }
  func.func @transform_0(%arg0: i32) -> (i32, i32) {
    %c0_i32 = arith.constant 0 : i32
    %c0_i32_0 = arith.constant 0 : i32
    return %c0_i32, %arg0 : i32, i32
  }
  func.func @transform_1(%arg0: i32) -> (i32, i32) {
    %c0_i32 = arith.constant 0 : i32
    %c0_i32_0 = arith.constant 0 : i32
    %c0_i32_1 = arith.constant 0 : i32
    return %c0_i32, %c0_i32_0 : i32, i32
  }
  func.func @transform_2(%arg0: i32) -> (i32, i32) {
    %c0_i32 = arith.constant 0 : i32
    %c0_i32_0 = arith.constant 0 : i32
    %c0_i32_1 = arith.constant 0 : i32
    return %c0_i32, %c0_i32_0 : i32, i32
  }
  func.func @transform_3(%arg0: i32) -> (i32, i32) {
    %c0_i32 = arith.constant 0 : i32
    %c0_i32_0 = arith.constant 0 : i32
    %c0_i32_1 = arith.constant 0 : i32
    return %c0_i32, %c0_i32_0 : i32, i32
  }
  func.func @transform_4(%arg0: i32) -> i32 {
    %c0_i32 = arith.constant 0 : i32
    %c0_i32_0 = arith.constant 0 : i32
    return %c0_i32 : i32
  }
  func.func @transform_5(%arg0: i32) -> (i32, i32) {
    %c0_i32 = arith.constant 0 : i32
    %c0_i32_0 = arith.constant 0 : i32
    return %c0_i32, %arg0 : i32, i32
  }
}

</mosaic_0001>

<llo_original>
// kernel: tpu_custom_call.1
$region0: #{tpu_custom_call.1}
  #allocation0 [shape = 'u32[]', space=smem, size = 0x4, offset = 0x4, fixed_abs, tag = 'smem constant byte address 0x4 - core index']
  #allocation1 [shape = 'u32[144,128]{1,0:T(1,128)}', space=vmem, size = 0x12000, scoped, tag = 'internal scratch']
  #allocation2 [shape = 'f32[1]{0:T(128)S(6)}', space=smem, size = 0x200, scoped, tag = 'scoped memory for tpu_custom_call.1']
  %s0 = inlined_call_operand.vmem [shape: f32[2,256], index: 0, kind: input, shape index: {}]
  %s1 = inlined_call_operand.vmem [shape: f32[5,2], index: 1, kind: input, shape index: {}]
  %s2 = inlined_call_operand.vmem [shape: f32[5,1], index: 2, kind: input, shape index: {}]
  %s3 = inlined_call_operand.vmem [shape: f32[5,1], index: 3, kind: input, shape index: {}]
  %s4 = inlined_call_operand.<no memory space> [shape: f32[1], index: 4, kind: input, shape index: {}]
  %s5 = inlined_call_operand.hbm [shape: f32[1,256], index: 5, kind: output, shape index: {}]
  %s6 = sld [smem:[#allocation0]]
  $region30: #{tpu_custom_call.1} parent=0
    _
  %s8 = ssub.s32 1, %s6
  %s9 = scalar_select 0, %s8, %s6
  %10 = sst [smem:[#allocation2]] %s4
  $region1: #{tpu_custom_call.1} parent=0
    #allocation3 [shape = 'u8[1024]{0}', space=vmem, size = 0x400, scoped, tag = 'output window, operand 0, single buffered']
    #allocation4 [shape = 's32[1]{0}', space=sflag, size = 0x4, scoped, tag = 'scoped memory for tpu_custom_call.1']
    %11 = vsyncpa [#allocation4], 0
    // Predicated region
    $region2: #{tpu_custom_call.1} parent=1 // pred_check
      _
    $region3: #{tpu_custom_call.1} parent=1 // pred_check_branch
      %13 = sbr.rel (0) target = $region5
    $region4: #{tpu_custom_call.1} parent=1 // pred_region
      _
    $region5: #{tpu_custom_call.1} parent=1 // pred_fallthru
      _
    // Predicated region
    $region6: #{tpu_custom_call.1} parent=1 // pred_check
      _
    $region7: #{tpu_custom_call.1} parent=1 // pred_check_branch
      %15 = sbr.rel (0) target = $region9
    $region8: #{tpu_custom_call.1} parent=1 // pred_region
      _
    $region9: #{tpu_custom_call.1} parent=1 // pred_fallthru
      _
    // Predicated region
    $region10: #{tpu_custom_call.1} parent=1 // pred_check
      _
    $region11: #{tpu_custom_call.1} parent=1 // pred_check_branch
      %17 = sbr.rel (0) target = $region13
    $region12: #{tpu_custom_call.1} parent=1 // pred_region
      _
    $region13: #{tpu_custom_call.1} parent=1 // pred_fallthru
      _
    // Predicated region
    $region14: #{tpu_custom_call.1} parent=1 // pred_check
      _
    $region15: #{tpu_custom_call.1} parent=1 // pred_check_branch
      %19 = sbr.rel (0) target = $region17
    $region16: #{tpu_custom_call.1} parent=1 // pred_region
      _
    $region17: #{tpu_custom_call.1} parent=1 // pred_fallthru
      _
    // Predicated region
    $region18: #{tpu_custom_call.1} parent=1 // pred_check
      _
    $region19: #{tpu_custom_call.1} parent=1 // pred_check_branch
      %21 = sbr.rel (0) target = $region21
    $region20: #{tpu_custom_call.1} parent=1 // pred_region
      _
    $region21: #{tpu_custom_call.1} parent=1 // pred_fallthru
      _
    %v22 = vld [vmem:[%s0] sm:$0xf]
    %v23 = vld [vmem:[%s2] sm:$0x1f]
    %v24 = vld [vmem:[%s1] sm:$0x1f]
    %26 = vset.pattern.permute.xlu0 0
    %27 = vperm.xlu0 %26, %v24
    %v28 = vpop.permute.xlu0 %27
    %v31 = vlaneseq
    %v32 = vshrl.u32 %v31, 7
    %v33 = vsub.s32 0, %v32
    %v34 = vrot.slane %v22, %v33
    %v35 = vlaneseq
    %v36 = vshrl.u32 %v35, 7
    %v37 = vsub.s32 2, %v36
    %v38 = vrot.slane %v22, %v37
    %v41 = vlaneseq
    %v42 = vshrl.u32 %v41, 7
    %v43 = vsub.s32 0, %v42
    %v44 = vrot.slane %v34, %v43
    %v45 = vlaneseq
    %v46 = vshrl.u32 %v45, 7
    %v47 = vsub.s32 0, %v46
    %v48 = vrot.slane %v38, %v47
    %v49 = vmul.f32 %v28, %v44
    %v50 = vmul.f32 %v28, %v48
    %52 = vset.pattern.permute.xlu0 0
    %53 = vperm.xlu0 %52, %v23
    %v54 = vpop.permute.xlu0 %53
    %v56 = vadd.f32 %v54, %v49
    %v57 = vadd.f32 %v54, %v50
    %58 = vset.pattern.permute.xlu0 1
    %59 = vperm.xlu0 %58, %v24
    %v60 = vpop.permute.xlu0 %59
    %v62 = vlaneseq
    %v63 = vshrl.u32 %v62, 7
    %v64 = vsub.s32 1, %v63
    %v65 = vrot.slane %v22, %v64
    %v66 = vlaneseq
    %v67 = vshrl.u32 %v66, 7
    %v68 = vsub.s32 3, %v67
    %v69 = vrot.slane %v22, %v68
    %v72 = vlaneseq
    %v73 = vshrl.u32 %v72, 7
    %v74 = vsub.s32 1, %v73
    %v75 = vrot.slane %v65, %v74
    %v76 = vlaneseq
    %v77 = vshrl.u32 %v76, 7
    %v78 = vsub.s32 1, %v77
    %v79 = vrot.slane %v69, %v78
    %v80 = vmul.f32 %v60, %v75
    %v81 = vmul.f32 %v60, %v79
    %v82 = vadd.f32 %v56, %v80
    %v83 = vadd.f32 %v57, %v81
    %v84 = vmax.f32 %v82, 0.0
    %v85 = vmax.f32 %v83, 0.0
    %v86 = vld [vmem:[%s3] sm:$0x1f]
    %88 = vset.pattern.permute.xlu0 0
    %89 = vperm.xlu0 %88, %v86
    %v90 = vpop.permute.xlu0 %89
    %v92 = vmul.f32 %v90, %v84
    %v93 = vmul.f32 %v90, %v85
    %vm94 = vcmask 1044480
    %v95 = vsel %vm94, %v92, 0.0
    %v96 = vrot.slane %v95, 4
    %v97 = vadd.f32 %v95, %v96
    %v98 = vrot.slane %v97, 2
    %v99 = vadd.f32 %v97, %v98
    %v100 = vrot.slane %v99, 1
    %v101 = vadd.f32 %v99, %v100
    %v102 = vsel %vm94, %v93, 0.0
    %v103 = vrot.slane %v102, 4
    %v104 = vadd.f32 %v102, %v103
    %v105 = vrot.slane %v104, 2
    %v106 = vadd.f32 %v104, %v105
    %v107 = vrot.slane %v106, 1
    %v108 = vadd.f32 %v106, %v107
    %s109 = sld [smem:[#allocation2]]
    %v110 = vstv %s109
    %v111 = vadd.f32 %v101, %v110
    %v112 = vadd.f32 %v108, %v110
    %v113 = vsub.f32 0.0, %v111
    %v114 = vsub.f32 0.0, %v112
    %v115 = vmul.f32 %v113, 1.442695
    %v116 = vpow.pop %v115
    %v117 = vmul.f32 %v114, 1.442695
    %v118 = vpow.pop %v117
    %v119 = vadd.f32 %v116, 1.0
    %v120 = vadd.f32 %v118, 1.0
    %v121 = vrcp.pop %v119
    %v122 = vmul.f32 1.0, %v121
    %v123 = vrcp.pop %v120
    %v124 = vmul.f32 1.0, %v123
    %v127 = vcombine.low %v122, %v124
    %v129 = vunpack.c.l.s4 1966171168
    %v130 = vunpack.c.0.s8 %v129
    %v131 = vlaneseq
    %v132 = vshrl.u32 %v131, 7
    %v133 = vsub.s32 %v130, %v132
    %v134 = vrot.slane %v127, %v133
    %v136 = vunpack.c.l.s4 1966171168
    %v137 = vunpack.c.0.s8 %v136
    %v138 = vlaneseq
    %v139 = vshrl.u32 %v138, 7
    %v140 = vsub.s32 %v137, %v139
    %v141 = vrot.slane %v134, %v140
    %v143 = vlaneseq
    %vm144 = vcmp.ge.s32.totalorder %v143, 0
    %vm145 = vcmp.lt.s32.totalorder %v143, 256
    %vm146 = vmand %vm144, %vm145
    %147 = vst.msk [vmem:[#allocation3] sm:$0x3] %vm146, %v141
    // Predicated region
    $region22: #{tpu_custom_call.1} parent=1 // pred_check
      _
    $region23: #{tpu_custom_call.1} parent=1 // pred_check_branch
      %149 = sbr.rel (0) target = $region25
    $region24: #{tpu_custom_call.1} parent=1 // pred_region
      %s151 = ssub.s32 32, 32
      %152 = vsyncadd [#allocation4], %s151
      %s154 = sshll.u32 [#allocation3], 4
      %s155 = int_to_ptr.vmem [resolvable:$true] %s154
      %157 = dma.vmem_to_hbm [thread:$0]  %s155, 32, %s5, [#allocation4]
    $region25: #{tpu_custom_call.1} parent=1 // pred_fallthru
      _
    // Predicated region
    $region26: #{tpu_custom_call.1} parent=1 // pred_check
      _
    $region27: #{tpu_custom_call.1} parent=1 // pred_check_branch
      %159 = sbr.rel (0) target = $region29
    $region28: #{tpu_custom_call.1} parent=1 // pred_region
      %160 = dma.done [#allocation4], 32
    $region29: #{tpu_custom_call.1} parent=1 // pred_fallthru
      _
    %161 = vsyncpa [#allocation4], 1

</llo_original>
